<compile_context>
chip_gen: v7x
topology: tpu7x:2x2x1
jax: 0.10.0
libtpu: 0.0.40
codegen_flags: <defaults>
</compile_context>

<pallas_src>
import functools

import jax
import jax.numpy as jnp
from jax import lax
from jax.experimental import pallas as pl
from jax.experimental.pallas import tpu as pltpu


def _round_up(x, m):
    return ((x + m - 1) // m) * m


def _shapelet_kernel(x_ref, proto2_ref, ynorm_ref, w_ref, probs_ref, feats_ref,
                     *, n_true, c_true):
    # x_ref:      (TB, Np, Lp)  block of bags (Np % 8 == 0, Lp % 128 == 0)
    # proto2_ref: (Dp, Lp)      2 * prototypes (pre-scaled in the wrapper)
    # ynorm_ref:  (1, Dp)       precomputed prototype norms (hoisted)
    # w_ref:      (3, Dp, Cp)   classifier weight, one aligned tile per statistic
    # probs_ref:  (TB, Cp)      softmax output (lane-dense)
    # feats_ref:  (3, TB, Dp)   [min, max, mean] distances, lane-dense tiles
    TB, Np, Lp = x_ref.shape
    Dp = proto2_ref.shape[0]
    Cp = w_ref.shape[2]

    # Np % 8 == 0 and Lp % 128 == 0  =>  these reshapes are zero-cost views.
    x = x_ref[...].reshape(TB * Np, Lp)
    xf = x.astype(jnp.float32)

    # ||x_i||  (NOT squared -- matches the torch .norm usage exactly).
    x_norm = jnp.sqrt(jnp.sum(xf * xf, axis=1, keepdims=True))          # (TB*Np, 1)

    # One big (TB*Np, Lp) x (Lp, Dp) MXU matmul; prototypes are pre-scaled by 2
    # so this already equals 2 * <x, y> and no per-element vmul is needed.
    xy2 = lax.dot_general(x, proto2_ref[...],
                          dimension_numbers=(((1,), (1,)), ((), ())),
                          preferred_element_type=jnp.float32)           # (TB*Np, Dp)

    dist = jnp.maximum(x_norm + ynorm_ref[...] - xy2, 0.0)              # clamp(0, inf)
    dist = dist.reshape(TB, Np, Dp)

    if Np != n_true:
        # Instance rows >= n_true are zero padding: exclude them from the stats.
        row = lax.broadcasted_iota(jnp.int32, (TB, Np, Dp), 1)
        valid = row < n_true
        dmin = jnp.min(jnp.where(valid, dist, jnp.inf), axis=1)
        dmax = jnp.max(jnp.where(valid, dist, 0.0), axis=1)             # dist >= 0
        dsum = jnp.sum(jnp.where(valid, dist, 0.0), axis=1)
    else:
        dmin = jnp.min(dist, axis=1)
        dmax = jnp.max(dist, axis=1)
        dsum = jnp.sum(dist, axis=1)
    dmean = dsum * (1.0 / n_true)

    # Lane-dense stores: each statistic lands at lane offset 0 of its own tile.
    feats_ref[0] = dmin
    feats_ref[1] = dmax
    feats_ref[2] = dmean

    # Linear(3D -> C, no bias) as three aligned (Dp, Cp) tiles, then softmax.
    z = jnp.dot(dmin, w_ref[0], preferred_element_type=jnp.float32)
    z = z + jnp.dot(dmax, w_ref[1], preferred_element_type=jnp.float32)
    z = z + jnp.dot(dmean, w_ref[2], preferred_element_type=jnp.float32)

    if Cp != c_true:
        # Padded classes must carry zero softmax mass.
        col = lax.broadcasted_iota(jnp.int32, (TB, Cp), 1)
        z = jnp.where(col < c_true, z, -jnp.inf)

    z = z - jnp.max(z, axis=-1, keepdims=True)
    e = jnp.exp(z)
    # approx=False: probability rows sum to 1 (parity with the f32 reference).
    probs_ref[...] = e * pl.reciprocal(jnp.sum(e, axis=-1, keepdims=True),
                                       approx=False)


def _vmem_budget_bytes():
    cap = 64 * 1024 * 1024  # conservative fallback (works on every generation)
    try:
        cap = int(getattr(pltpu.get_tpu_info(), "vmem_capacity_bytes", cap))
    except Exception:
        pass
    # Leave headroom for compiler-internal scratch:
    # ~48 MiB on v7x (64 MiB/TC), ~96 MiB on v5e/v6e (128 MiB).
    return (cap * 3) // 4


def _pick_tb(B, Np, Lp, Dp, Cp, x_bytes, budget):
    # Resident (grid-invariant) blocks, conservatively counted double-buffered.
    fixed = 2 * (Dp * Lp * 4 + 8 * Dp * 4 + 3 * Dp * Cp * 4)
    # Per-bag bytes: double-buffered X block + double-buffered outputs + the
    # largest in-kernel intermediates (f32 X copy, dist, x_norm).
    per_bag = (2 * Np * Lp * x_bytes
               + 2 * 3 * Dp * 4
               + 2 * Cp * 4
               + Np * Lp * 4
               + Np * Dp * 4
               + 2 * Np * 4)
    avail = max(budget - fixed, 8 * per_bag)
    tb = max(8, (avail // per_bag) // 8 * 8)
    # Keep a handful of grid steps for pipelining (>= 2 steps also feeds both
    # v7x TensorCores) when B is large enough; otherwise cover B in one pass.
    tb = min(tb, max(8, _round_up(pl.cdiv(B, 4), 8)))
    tb = min(tb, _round_up(B, 8))
    return int(tb)


def shapelet_generator(X, prototypes, weight_t, *, use_bf16_inputs=False):
    """X: (B, N, L); prototypes: (D, L); weight_t: (3D, C) (= Linear weight.T).

    Returns (logits, features). "logits" are post-softmax probabilities,
    exactly as in the PyTorch module (Softmax is part of linear_layer).
    """
    X = jnp.asarray(X, jnp.float32)
    prototypes = jnp.asarray(prototypes, jnp.float32)
    weight_t = jnp.asarray(weight_t, jnp.float32)

    B, N, L = X.shape
    D = prototypes.shape[0]
    C = weight_t.shape[1]

    # Lane/sublane alignment: L, D, C -> multiples of 128; N -> multiple of 8.
    Lp = _round_up(L, 128)
    Dp = _round_up(D, 128)
    Cp = _round_up(C, 128)
    Np = _round_up(N, 8)

    x_dtype = jnp.bfloat16 if use_bf16_inputs else jnp.float32
    budget = _vmem_budget_bytes()
    TB = _pick_tb(B, Np, Lp, Dp, Cp, jnp.dtype(x_dtype).itemsize, budget)
    Bp = _round_up(B, TB)

    Xp = jnp.pad(X, ((0, Bp - B), (0, Np - N), (0, Lp - L))).astype(x_dtype)

    proto_p = jnp.pad(prototypes, ((0, Dp - D), (0, Lp - L)))
    # Pre-scale by 2 so the kernel never multiplies the (TB*N, D) product by 2.
    proto2 = (2.0 * proto_p).astype(x_dtype)
    # Prototype norms computed once here (padded rows -> norm 0).
    y_norm = jnp.sqrt(jnp.sum(proto_p * proto_p, axis=1))[None, :]       # (1, Dp)

    # (3D, C) -> three aligned (Dp, Cp) tiles: w3[k] multiplies statistic k.
    w3 = jnp.pad(weight_t.reshape(3, D, C), ((0, 0), (0, Dp - D), (0, Cp - C)))

    kernel = functools.partial(_shapelet_kernel, n_true=N, c_true=C)

    probs, feats3 = pl.pallas_call(
        kernel,
        out_shape=(
            jax.ShapeDtypeStruct((Bp, Cp), jnp.float32),
            jax.ShapeDtypeStruct((3, Bp, Dp), jnp.float32),
        ),
        grid_spec=pltpu.PrefetchScalarGridSpec(
            num_scalar_prefetch=0,
            grid=(Bp // TB,),
            in_specs=[
                pl.BlockSpec((TB, Np, Lp), lambda b: (b, 0, 0)),
                pl.BlockSpec((Dp, Lp), lambda b: (0, 0)),
                pl.BlockSpec((1, Dp), lambda b: (0, 0)),
                pl.BlockSpec((3, Dp, Cp), lambda b: (0, 0, 0)),
            ],
            out_specs=[
                pl.BlockSpec((TB, Cp), lambda b: (b, 0)),
                pl.BlockSpec((3, TB, Dp), lambda b: (0, b, 0)),
            ],
        ),
        compiler_params=pltpu.CompilerParams(
            dimension_semantics=("parallel",),
            vmem_limit_bytes=int(budget),
        ),
    )(Xp, proto2, y_norm, w3)

    logits = probs[:B, :C]
    feats = jnp.transpose(feats3[:, :B, :D], (1, 0, 2)).reshape(B, 3 * D)
    return logits, feats


def _reference(X, prototypes, weight_t):
    x_norm = jnp.linalg.norm(X, axis=2)[:, :, None]
    y_norm = jnp.linalg.norm(prototypes, axis=1)[None, None, :]
    dist = x_norm + y_norm - 2.0 * jnp.einsum("bnl,dl->bnd", X, prototypes)
    dist = jnp.clip(dist, 0.0, None)
    feats = jnp.concatenate(
        [dist.min(axis=1), dist.max(axis=1), dist.mean(axis=1)], axis=1)
    logits = jax.nn.softmax(feats @ weight_t, axis=-1)
    return logits, feats


if __name__ == "__main__":
    def run_case(B, N, L, D, C):
        key = jax.random.PRNGKey(0)
        k_x, k_p, k_w = jax.random.split(key, 3)
        X = jax.random.normal(k_x, (B, N, L), dtype=jnp.float32)
        # prototypes ~ torch.randn((1, D, L)); stored squeezed as (D, L)
        prototypes = jax.random.normal(k_p, (D, L), dtype=jnp.float32)
        # nn.Linear(3*D, C, bias=False): weight is (C, 3D); pass transposed
        bound = 1.0 / (3 * D) ** 0.5
        weight = jax.random.uniform(k_w, (C, 3 * D), dtype=jnp.float32,
                                    minval=-bound, maxval=bound)
        weight_t = weight.T

        logits, feats = shapelet_generator(X, prototypes, weight_t)
        jax.block_until_ready((logits, feats))

        ref_logits, ref_feats = _reference(X, prototypes, weight_t)
        assert logits.shape == (B, C) and feats.shape == (B, 3 * D)
        assert jnp.allclose(logits, ref_logits, atol=1e-5, rtol=1e-5)
        assert jnp.allclose(feats, ref_feats, atol=1e-4, rtol=1e-4)

    # Case 1: N already a multiple of 8 (no instance masking), B needs padding.
    run_case(B=10, N=8, L=16, D=4, C=3)
    # Case 2: ragged everything (N, L, D, C all padded; instance mask active).
    run_case(B=5, N=6, L=9, D=3, C=2)

    print("KERNEL_OK")
</pallas_src>

<mosaic_0001>
module attributes {stable_mosaic.version = 11 : i64} {
  func.func @_shapelet_kernel(%arg0: i32, %arg1: memref<8x8x128xf32, #tpu.memory_space<vmem>>, %arg2: memref<128x128xf32, #tpu.memory_space<vmem>>, %arg3: memref<1x128xf32, #tpu.memory_space<vmem>>, %arg4: memref<3x128x128xf32, #tpu.memory_space<vmem>>, %arg5: memref<8x128xf32, #tpu.memory_space<vmem>>, %arg6: memref<3x8x128xf32, #tpu.memory_space<vmem>>) attributes {dimension_semantics = [#tpu.dimension_semantics<parallel>], iteration_bounds = array<i64: 2>, scalar_prefetch = 0 : i64, scratch_operands = 0 : i64, tpu.core_type = #tpu.core_type<tc>, window_params = [{transform_indices = @transform_0, window_bounds = array<i64: 8, 8, 128>}, {pipeline_mode = #tpu.pipeline_mode<synchronous>, transform_indices = @transform_1, window_bounds = array<i64: 128, 128>}, {pipeline_mode = #tpu.pipeline_mode<synchronous>, transform_indices = @transform_2, window_bounds = array<i64: 1, 128>}, {pipeline_mode = #tpu.pipeline_mode<synchronous>, transform_indices = @transform_3, window_bounds = array<i64: 3, 128, 128>}, {transform_indices = @transform_4, window_bounds = array<i64: 8, 128>}, {transform_indices = @transform_5, window_bounds = array<i64: 3, 8, 128>}]} {
    %c0 = arith.constant 0 : index
    %c0_0 = arith.constant 0 : index
    %c0_1 = arith.constant 0 : index
    %0 = vector.load %arg1[%c0, %c0_0, %c0_1] : memref<8x8x128xf32, #tpu.memory_space<vmem>>, vector<8x8x128xf32>
    %1 = vector.shape_cast %0 : vector<8x8x128xf32> to vector<64x128xf32>
    %2 = arith.mulf %1, %1 : vector<64x128xf32>
    %cst = arith.constant dense<0.000000e+00> : vector<64xf32>
    %3 = vector.multi_reduction <add>, %2, %cst [1] : vector<64x128xf32> to vector<64xf32>
    %4 = vector.shape_cast %3 : vector<64xf32> to vector<64x1xf32>
    %5 = math.sqrt %4 : vector<64x1xf32>
    %c0_2 = arith.constant 0 : index
    %c0_3 = arith.constant 0 : index
    %6 = vector.load %arg2[%c0_2, %c0_3] : memref<128x128xf32, #tpu.memory_space<vmem>>, vector<128x128xf32>
    %cst_4 = arith.constant dense<0.000000e+00> : vector<64x128xf32>
    %7 = tpu.matmul %1, %6, %cst_4 {dimension_numbers = #tpu.dot_dimension_numbers<[1], [1], [0], [0], [0, 0, 1, 0], [], []>} : vector<64x128xf32>, vector<128x128xf32>, vector<64x128xf32> -> vector<64x128xf32>
    %c0_5 = arith.constant 0 : index
    %c0_6 = arith.constant 0 : index
    %8 = vector.load %arg3[%c0_5, %c0_6] : memref<1x128xf32, #tpu.memory_space<vmem>>, vector<1x128xf32>
    %9 = vector.broadcast %5 : vector<64x1xf32> to vector<64x128xf32>
    %10 = vector.broadcast %8 : vector<1x128xf32> to vector<64x128xf32>
    %11 = arith.addf %9, %10 : vector<64x128xf32>
    %12 = arith.subf %11, %7 : vector<64x128xf32>
    %cst_7 = arith.constant 0.000000e+00 : f32
    %13 = vector.broadcast %cst_7 : f32 to vector<64x128xf32>
    %14 = arith.maximumf %12, %13 : vector<64x128xf32>
    %15 = vector.shape_cast %14 : vector<64x128xf32> to vector<8x8x128xf32>
    %cst_8 = arith.constant dense<0x7F800000> : vector<8x128xf32>
    %16 = vector.multi_reduction <minimumf>, %15, %cst_8 [1] : vector<8x8x128xf32> to vector<8x128xf32>
    %cst_9 = arith.constant dense<0xFF800000> : vector<8x128xf32>
    %17 = vector.multi_reduction <maximumf>, %15, %cst_9 [1] : vector<8x8x128xf32> to vector<8x128xf32>
    %cst_10 = arith.constant dense<0.000000e+00> : vector<8x128xf32>
    %18 = vector.multi_reduction <add>, %15, %cst_10 [1] : vector<8x8x128xf32> to vector<8x128xf32>
    %cst_11 = arith.constant 1.250000e-01 : f32
    %19 = vector.broadcast %cst_11 : f32 to vector<8x128xf32>
    %20 = arith.mulf %18, %19 : vector<8x128xf32>
    %c0_12 = arith.constant 0 : index
    %c0_13 = arith.constant 0 : index
    %c0_14 = arith.constant 0 : index
    %21 = vector.load %arg6[%c0_12, %c0_13, %c0_14] : memref<3x8x128xf32, #tpu.memory_space<vmem>>, vector<1x8x128xf32>
    %22 = vector.shape_cast %21 : vector<1x8x128xf32> to vector<8x128xf32>
    %23 = vector.shape_cast %16 : vector<8x128xf32> to vector<1x8x128xf32>
    tpu.vector_store %arg6[%c0_12, %c0_13, %c0_14], %23 {strides = array<i32>} : memref<3x8x128xf32, #tpu.memory_space<vmem>>, vector<1x8x128xf32>,
    %c1 = arith.constant 1 : index
    %c0_15 = arith.constant 0 : index
    %c0_16 = arith.constant 0 : index
    %24 = vector.load %arg6[%c1, %c0_15, %c0_16] : memref<3x8x128xf32, #tpu.memory_space<vmem>>, vector<1x8x128xf32>
    %25 = vector.shape_cast %24 : vector<1x8x128xf32> to vector<8x128xf32>
    %26 = vector.shape_cast %17 : vector<8x128xf32> to vector<1x8x128xf32>
    tpu.vector_store %arg6[%c1, %c0_15, %c0_16], %26 {strides = array<i32>} : memref<3x8x128xf32, #tpu.memory_space<vmem>>, vector<1x8x128xf32>,
    %c2 = arith.constant 2 : index
    %c0_17 = arith.constant 0 : index
    %c0_18 = arith.constant 0 : index
    %27 = vector.load %arg6[%c2, %c0_17, %c0_18] : memref<3x8x128xf32, #tpu.memory_space<vmem>>, vector<1x8x128xf32>
    %28 = vector.shape_cast %27 : vector<1x8x128xf32> to vector<8x128xf32>
    %29 = vector.shape_cast %20 : vector<8x128xf32> to vector<1x8x128xf32>
    tpu.vector_store %arg6[%c2, %c0_17, %c0_18], %29 {strides = array<i32>} : memref<3x8x128xf32, #tpu.memory_space<vmem>>, vector<1x8x128xf32>,
    %c0_19 = arith.constant 0 : index
    %c0_20 = arith.constant 0 : index
    %c0_21 = arith.constant 0 : index
    %30 = vector.load %arg4[%c0_19, %c0_20, %c0_21] : memref<3x128x128xf32, #tpu.memory_space<vmem>>, vector<1x128x128xf32>
    %31 = vector.shape_cast %30 : vector<1x128x128xf32> to vector<128x128xf32>
    %cst_22 = arith.constant dense<0.000000e+00> : vector<8x128xf32>
    %32 = tpu.matmul %16, %31, %cst_22 {dimension_numbers = #tpu.dot_dimension_numbers<[1], [0], [0], [1], [0, 0, 1, 1], [], []>} : vector<8x128xf32>, vector<128x128xf32>, vector<8x128xf32> -> vector<8x128xf32>
    %c1_23 = arith.constant 1 : index
    %c0_24 = arith.constant 0 : index
    %c0_25 = arith.constant 0 : index
    %33 = vector.load %arg4[%c1_23, %c0_24, %c0_25] : memref<3x128x128xf32, #tpu.memory_space<vmem>>, vector<1x128x128xf32>
    %34 = vector.shape_cast %33 : vector<1x128x128xf32> to vector<128x128xf32>
    %cst_26 = arith.constant dense<0.000000e+00> : vector<8x128xf32>
    %35 = tpu.matmul %17, %34, %cst_26 {dimension_numbers = #tpu.dot_dimension_numbers<[1], [0], [0], [1], [0, 0, 1, 1], [], []>} : vector<8x128xf32>, vector<128x128xf32>, vector<8x128xf32> -> vector<8x128xf32>
    %36 = arith.addf %32, %35 : vector<8x128xf32>
    %c2_27 = arith.constant 2 : index
    %c0_28 = arith.constant 0 : index
    %c0_29 = arith.constant 0 : index
    %37 = vector.load %arg4[%c2_27, %c0_28, %c0_29] : memref<3x128x128xf32, #tpu.memory_space<vmem>>, vector<1x128x128xf32>
    %38 = vector.shape_cast %37 : vector<1x128x128xf32> to vector<128x128xf32>
    %cst_30 = arith.constant dense<0.000000e+00> : vector<8x128xf32>
    %39 = tpu.matmul %20, %38, %cst_30 {dimension_numbers = #tpu.dot_dimension_numbers<[1], [0], [0], [1], [0, 0, 1, 1], [], []>} : vector<8x128xf32>, vector<128x128xf32>, vector<8x128xf32> -> vector<8x128xf32>
    %40 = arith.addf %36, %39 : vector<8x128xf32>
    %41 = tpu.iota {dimensions = array<i32: 1>} : vector<8x128xi32>
    %c3_i32 = arith.constant 3 : i32
    %42 = vector.broadcast %c3_i32 : i32 to vector<8x128xi32>
    %43 = arith.cmpi slt, %41, %42 : vector<8x128xi32>
    %cst_31 = arith.constant 0xFF800000 : f32
    %44 = vector.broadcast %cst_31 : f32 to vector<8x128xf32>
    %45 = arith.select %43, %40, %44 : vector<8x128xi1>, vector<8x128xf32>
    %cst_32 = arith.constant dense<0xFF800000> : vector<8xf32>
    %46 = vector.multi_reduction <maximumf>, %45, %cst_32 [1] : vector<8x128xf32> to vector<8xf32>
    %47 = vector.shape_cast %46 : vector<8xf32> to vector<8x1xf32>
    %48 = vector.broadcast %47 : vector<8x1xf32> to vector<8x128xf32>
    %49 = arith.subf %45, %48 : vector<8x128xf32>
    %50 = math.exp %49 : vector<8x128xf32>
    %cst_33 = arith.constant dense<0.000000e+00> : vector<8xf32>
    %51 = vector.multi_reduction <add>, %50, %cst_33 [1] : vector<8x128xf32> to vector<8xf32>
    %52 = vector.shape_cast %51 : vector<8xf32> to vector<8x1xf32>
    %53 = tpu.reciprocal %52 : vector<8x1xf32> -> vector<8x1xf32>
    %54 = vector.broadcast %53 : vector<8x1xf32> to vector<8x128xf32>
    %55 = arith.mulf %50, %54 : vector<8x128xf32>
    %c0_34 = arith.constant 0 : index
    %c0_35 = arith.constant 0 : index
    %56 = vector.load %arg5[%c0_34, %c0_35] : memref<8x128xf32, #tpu.memory_space<vmem>>, vector<8x128xf32>
    tpu.vector_store %arg5[%c0_34, %c0_35], %55 {strides = array<i32>} : memref<8x128xf32, #tpu.memory_space<vmem>>, vector<8x128xf32>,
    return
  }
  func.func @transform_0(%arg0: i32) -> (i32, i32, i32) {
    %c0_i32 = arith.constant 0 : i32
    %c0_i32_0 = arith.constant 0 : i32
    %c0_i32_1 = arith.constant 0 : i32
    return %arg0, %c0_i32, %c0_i32_0 : i32, i32, i32
  }
  func.func @transform_1(%arg0: i32) -> (i32, i32) {
    %c0_i32 = arith.constant 0 : i32
    %c0_i32_0 = arith.constant 0 : i32
    %c0_i32_1 = arith.constant 0 : i32
    return %c0_i32, %c0_i32_0 : i32, i32
  }
  func.func @transform_2(%arg0: i32) -> (i32, i32) {
    %c0_i32 = arith.constant 0 : i32
    %c0_i32_0 = arith.constant 0 : i32
    %c0_i32_1 = arith.constant 0 : i32
    return %c0_i32, %c0_i32_0 : i32, i32
  }
  func.func @transform_3(%arg0: i32) -> (i32, i32, i32) {
    %c0_i32 = arith.constant 0 : i32
    %c0_i32_0 = arith.constant 0 : i32
    %c0_i32_1 = arith.constant 0 : i32
    %c0_i32_2 = arith.constant 0 : i32
    return %c0_i32, %c0_i32_0, %c0_i32_1 : i32, i32, i32
  }
  func.func @transform_4(%arg0: i32) -> (i32, i32) {
    %c0_i32 = arith.constant 0 : i32
    %c0_i32_0 = arith.constant 0 : i32
    return %arg0, %c0_i32 : i32, i32
  }
  func.func @transform_5(%arg0: i32) -> (i32, i32, i32) {
    %c0_i32 = arith.constant 0 : i32
    %c0_i32_0 = arith.constant 0 : i32
    %c0_i32_1 = arith.constant 0 : i32
    return %c0_i32, %arg0, %c0_i32_0 : i32, i32, i32
  }
}

</mosaic_0001>

<llo_original>
// kernel: tpu_custom_call.1
$region0: #{tpu_custom_call.1}
  #allocation0 [shape = 'u32[]', space=smem, size = 0x4, offset = 0x4, fixed_abs, tag = 'smem constant byte address 0x4 - core index']
  #allocation1 [shape = 'u32[144,128]{1,0:T(1,128)}', space=vmem, size = 0x12000, scoped, tag = 'internal scratch']
  %s0 = inlined_call_operand.hbm [shape: f32[16,8,128], index: 0, kind: input, shape index: {}]
  %s1 = inlined_call_operand.hbm [shape: f32[128,128], index: 1, kind: input, shape index: {}]
  %s2 = inlined_call_operand.vmem [shape: f32[1,128], index: 2, kind: input, shape index: {}]
  %s3 = inlined_call_operand.hbm [shape: f32[3,128,128], index: 3, kind: input, shape index: {}]
  %s4 = inlined_call_operand.hbm [shape: f32[16,128], index: 4, kind: output, shape index: {0}]
  %s5 = inlined_call_operand.hbm [shape: f32[3,16,128], index: 5, kind: output, shape index: {1}]
  %6 = xla_tuple %s4, %s5
  %s7 = sld [smem:[#allocation0]]
  $region69: #{tpu_custom_call.1} parent=0
    _
  %s9 = ssub.s32 1, %s7
  %s10 = scalar_select 0, %s9, %s7
  $region1: #{tpu_custom_call.1} parent=0
    #allocation2 [shape = 'u8[65536]{0}', space=vmem, size = 0x10000, scoped, tag = 'input window, operand 0']
    #allocation3 [shape = 's32[2]{0}', space=sflag, size = 0x8, scoped, tag = 'scoped memory for tpu_custom_call.1']
    #allocation4 [shape = 's32[2]{0}', space=sflag, size = 0x8, scoped, tag = 'scoped memory for tpu_custom_call.1']
    #allocation5 [shape = 'u8[65536]{0}', space=vmem, size = 0x10000, scoped, tag = 'input window, operand 1, single buffered']
    #allocation6 [shape = 's32[1]{0}', space=sflag, size = 0x4, scoped, tag = 'scoped memory for tpu_custom_call.1']
    #allocation7 [shape = 'u8[196608]{0}', space=vmem, size = 0x30000, scoped, tag = 'input window, operand 3, single buffered']
    #allocation8 [shape = 'u8[8192]{0}', space=vmem, size = 0x2000, scoped, tag = 'output window, operand 0']
    #allocation9 [shape = 'u8[24576]{0}', space=vmem, size = 0x6000, scoped, tag = 'output window, operand 1']
    #allocation10 [shape = 's32[2]{0}', space=sflag, size = 0x8, scoped, tag = 'scoped memory for tpu_custom_call.1']
    %11 = vsyncpa [#allocation3], 0
    %s12 = scalar_lea.sflag [#allocation3], 1
    %13 = vsyncpa %s12, 0
    %14 = vsyncpa [#allocation6], 0
    %15 = vsyncpa [#allocation4], 0
    %s16 = scalar_lea.sflag [#allocation4], 1
    %17 = vsyncpa %s16, 0
    %18 = vsyncpa [#allocation10], 0
    %s19 = scalar_lea.sflag [#allocation10], 1
    %20 = vsyncpa %s19, 0
    loop: start=0, step=1, limit=4
    $region2: #{tpu_custom_call.1} parent=1 // loop_pre_header
      _
    $region3: #{tpu_custom_call.1} parent=1 // loop_header
      %s22 = sphi 0, %s26
      %p23 = scmp.ge.s32.totalorder %s22, 4
      %s32 = sphi 0, %s34
      %s35 = sphi 0, %s32
      %s36 = sphi 0, %s35
      %s52 = sphi 0, %s36
      %s56 = sphi 0, %s56
      %s58 = sphi 0, %s56
      %s59 = sphi 0, %s58
      %s73 = sphi 0, %s59
      %s77 = sphi 0, %s77
      %s79 = sphi 0, %s77
      %s80 = sphi 0, %s79
      %s94 = sphi 0, %s80
      %s98 = sphi 0, %s98
      %s100 = sphi 0, %s98
      %s101 = sphi 0, %s100
      %s115 = sphi 0, %s101
      %s121 = sphi 0, %s123
      %s124 = sphi 0, %s121
      %s125 = sphi 0, %s124
      %s141 = sphi 0, %s125
      %s147 = sphi 0, %s149
      %s150 = sphi 0, %s147
      %s151 = sphi 0, %s150
      %s167 = sphi 0, %s151
    $region4: #{tpu_custom_call.1} parent=1 // loop_header_branch
      %25 = sbr.rel (%p23) target = $region8
    $region5: #{tpu_custom_call.1} parent=1 // loop_body
      %s27 = ssub.s32 %s22, 1
      %s28 = ssub.s32 %s22, 2
      %s29 = sadd.s32 %s22, 1
      %s30 = ssub.s32 %s22, %s29
      %p31 = scmp.eq.s32.totalorder %s30, 0
      %s33 = sadd.s32 %s32, 1
      %s34 = scalar_select %p31, %s32, %s33
      %p37 = pneg %p31
      %p38 = scmp.eq.s32.totalorder %s22, 1
      %p39 = por %p37, %p38
      %p40 = scmp.ne.s32.totalorder %s32, %s35
      %p41 = scmp.eq.s32.totalorder %s22, 0
      %p42 = por %p40, %p41
      %p43 = scmp.ne.s32.totalorder %s32, %s35
      %p44 = scmp.eq.s32.totalorder %s27, 1
      %p45 = por %p43, %p44
      %p46 = scmp.ne.s32.totalorder %s35, %s36
      %p47 = scmp.eq.s32.totalorder %s27, 0
      %p48 = por %p46, %p47
      %p49 = scmp.ne.s32.totalorder %s35, %s36
      %p50 = scmp.eq.s32.totalorder %s28, 1
      %p51 = por %p49, %p50
      %p53 = scmp.ne.s32.totalorder %s36, %s52
      %p54 = scmp.eq.s32.totalorder %s28, 0
      %p55 = por %p53, %p54
      %s57 = sadd.s32 %s56, 1
      %p60 = scmp.eq.s32.totalorder %s22, 1
      %p61 = scmp.ne.s32.totalorder %s56, %s58
      %p62 = scmp.eq.s32.totalorder %s22, 0
      %p63 = por %p61, %p62
      %p64 = scmp.ne.s32.totalorder %s56, %s58
      %p65 = scmp.eq.s32.totalorder %s27, 1
      %p66 = por %p64, %p65
      %p67 = scmp.ne.s32.totalorder %s58, %s59
      %p68 = scmp.eq.s32.totalorder %s27, 0
      %p69 = por %p67, %p68
      %p70 = scmp.ne.s32.totalorder %s58, %s59
      %p71 = scmp.eq.s32.totalorder %s28, 1
      %p72 = por %p70, %p71
      %p74 = scmp.ne.s32.totalorder %s59, %s73
      %p75 = scmp.eq.s32.totalorder %s28, 0
      %p76 = por %p74, %p75
      %s78 = sadd.s32 %s77, 1
      %p81 = scmp.eq.s32.totalorder %s22, 1
      %p82 = scmp.ne.s32.totalorder %s77, %s79
      %p83 = scmp.eq.s32.totalorder %s22, 0
      %p84 = por %p82, %p83
      %p85 = scmp.ne.s32.totalorder %s77, %s79
      %p86 = scmp.eq.s32.totalorder %s27, 1
      %p87 = por %p85, %p86
      %p88 = scmp.ne.s32.totalorder %s79, %s80
      %p89 = scmp.eq.s32.totalorder %s27, 0
      %p90 = por %p88, %p89
      %p91 = scmp.ne.s32.totalorder %s79, %s80
      %p92 = scmp.eq.s32.totalorder %s28, 1
      %p93 = por %p91, %p92
      %p95 = scmp.ne.s32.totalorder %s80, %s94
      %p96 = scmp.eq.s32.totalorder %s28, 0
      %p97 = por %p95, %p96
      %s99 = sadd.s32 %s98, 1
      %p102 = scmp.eq.s32.totalorder %s22, 1
      %p103 = scmp.ne.s32.totalorder %s98, %s100
      %p104 = scmp.eq.s32.totalorder %s22, 0
      %p105 = por %p103, %p104
      %p106 = scmp.ne.s32.totalorder %s98, %s100
      %p107 = scmp.eq.s32.totalorder %s27, 1
      %p108 = por %p106, %p107
      %p109 = scmp.ne.s32.totalorder %s100, %s101
      %p110 = scmp.eq.s32.totalorder %s27, 0
      %p111 = por %p109, %p110
      %p112 = scmp.ne.s32.totalorder %s100, %s101
      %p113 = scmp.eq.s32.totalorder %s28, 1
      %p114 = por %p112, %p113
      %p116 = scmp.ne.s32.totalorder %s101, %s115
      %p117 = scmp.eq.s32.totalorder %s28, 0
      %p118 = por %p116, %p117
      %s119 = ssub.s32 %s22, %s29
      %p120 = scmp.eq.s32.totalorder %s119, 0
      %s122 = sadd.s32 %s121, 1
      %s123 = scalar_select %p120, %s121, %s122
      %p126 = pneg %p120
      %p127 = scmp.eq.s32.totalorder %s22, 1
      %p128 = por %p126, %p127
      %p129 = scmp.ne.s32.totalorder %s121, %s124
      %p130 = scmp.eq.s32.totalorder %s22, 0
      %p131 = por %p129, %p130
      %p132 = scmp.ne.s32.totalorder %s121, %s124
      %p133 = scmp.eq.s32.totalorder %s27, 1
      %p134 = por %p132, %p133
      %p135 = scmp.ne.s32.totalorder %s124, %s125
      %p136 = scmp.eq.s32.totalorder %s27, 0
      %p137 = por %p135, %p136
      %p138 = scmp.ne.s32.totalorder %s124, %s125
      %p139 = scmp.eq.s32.totalorder %s28, 1
      %p140 = por %p138, %p139
      %p142 = scmp.ne.s32.totalorder %s125, %s141
      %p143 = scmp.eq.s32.totalorder %s28, 0
      %p144 = por %p142, %p143
      %s145 = ssub.s32 %s22, %s29
      %p146 = scmp.eq.s32.totalorder %s145, 0
      %s148 = sadd.s32 %s147, 1
      %s149 = scalar_select %p146, %s147, %s148
      %p152 = pneg %p146
      %p153 = scmp.eq.s32.totalorder %s22, 1
      %p154 = por %p152, %p153
      %p155 = scmp.ne.s32.totalorder %s147, %s150
      %p156 = scmp.eq.s32.totalorder %s22, 0
      %p157 = por %p155, %p156
      %p158 = scmp.ne.s32.totalorder %s147, %s150
      %p159 = scmp.eq.s32.totalorder %s27, 1
      %p160 = por %p158, %p159
      %p161 = scmp.ne.s32.totalorder %s150, %s151
      %p162 = scmp.eq.s32.totalorder %s27, 0
      %p163 = por %p161, %p162
      %p164 = scmp.ne.s32.totalorder %s150, %s151
      %p165 = scmp.eq.s32.totalorder %s28, 1
      %p166 = por %p164, %p165
      %p168 = scmp.ne.s32.totalorder %s151, %s167
      %p169 = scmp.eq.s32.totalorder %s28, 0
      %p170 = por %p168, %p169
      %p171 = scmp.le.s32.totalorder 1, %s22
      %p172 = scmp.lt.s32.totalorder %s22, 3
      %p173 = pnand %p171, %p172
      %p174 = pneg %p173
      // Predicated region
      $region9: #{tpu_custom_call.1} parent=5 // pred_check
        _
      $region10: #{tpu_custom_call.1} parent=5 // pred_check_branch
        %176 = sbr.rel (%p173) target = $region12
      $region11: #{tpu_custom_call.1} parent=5 // pred_region
        %s177 = ssub.s32 %s22, 1
        // Predicated region
        $region13: #{tpu_custom_call.1} parent=11 // pred_check
          %p178 = pneg %p69
        $region14: #{tpu_custom_call.1} parent=11 // pred_check_branch
          %180 = sbr.rel (%p178) target = $region16
        $region15: #{tpu_custom_call.1} parent=11 // pred_region
          %s182 = ssub.s32 2048, 2048
          %183 = vsyncadd [#allocation6], %s182
          %s184 = sshll.u32 [#allocation5], 4
          %s185 = int_to_ptr.vmem [resolvable:$true] %s184
          %190 = dma.hbm_to_vmem [thread:$0]  %s1, 2048, %s185, [#allocation6], 128, 128, 8
        $region16: #{tpu_custom_call.1} parent=11 // pred_fallthru
          _
        // Predicated region
        $region17: #{tpu_custom_call.1} parent=11 // pred_check
          %p191 = pneg %p90
        $region18: #{tpu_custom_call.1} parent=11 // pred_check_branch
          %193 = sbr.rel (%p191) target = $region20
        $region19: #{tpu_custom_call.1} parent=11 // pred_region
          _
        $region20: #{tpu_custom_call.1} parent=11 // pred_fallthru
          _
        // Predicated region
        $region21: #{tpu_custom_call.1} parent=11 // pred_check
          %p194 = pneg %p111
        $region22: #{tpu_custom_call.1} parent=11 // pred_check_branch
          %196 = sbr.rel (%p194) target = $region24
        $region23: #{tpu_custom_call.1} parent=11 // pred_region
          %s198 = ssub.s32 6144, 6144
          %199 = vsyncadd [#allocation6], %s198
          %s200 = sshll.u32 [#allocation7], 4
          %s201 = int_to_ptr.vmem [resolvable:$true] %s200
          %206 = dma.hbm_to_vmem [thread:$0]  %s3, 6144, %s201, [#allocation6], 128, 128, 8
        $region24: #{tpu_custom_call.1} parent=11 // pred_fallthru
          _
      $region12: #{tpu_custom_call.1} parent=5 // pred_fallthru
        _
      %p207 = scmp.lt.s32.totalorder %s22, 2
      // Predicated region
      $region25: #{tpu_custom_call.1} parent=5 // pred_check
        %p208 = pneg %p207
      $region26: #{tpu_custom_call.1} parent=5 // pred_check_branch
        %210 = sbr.rel (%p208) target = $region28
      $region27: #{tpu_custom_call.1} parent=5 // pred_region
        // Predicated region
        $region29: #{tpu_custom_call.1} parent=27 // pred_check
          %p211 = pneg %p42
        $region30: #{tpu_custom_call.1} parent=27 // pred_check_branch
          %213 = sbr.rel (%p211) target = $region32
        $region31: #{tpu_custom_call.1} parent=27 // pred_region
          %s214 = sand.u32 %s32, 1
          %s215 = scalar_lea.sflag [#allocation3], %s214
          %s216 = sand.u32 %s32, 1
          %s217 = smul.addr %s216, 64
          %s218 = scalar_lea.vmem [#allocation2], %s217
          %s219 = smul.u32 8, %s22
          %s221 = ssub.s32 1024, 1024
          %222 = vsyncadd %s215, %s221
          %s223 = smul.addr %s219, 128
          %s224 = scalar_lea.hbm %s0, %s223
          %s225 = sshll.u32 %s218, 4
          %s226 = int_to_ptr.vmem [resolvable:$true] %s225
          %231 = dma.hbm_to_vmem [thread:$0]  %s224, 1024, %s226, %s215, 128, 128, 8
        $region32: #{tpu_custom_call.1} parent=27 // pred_fallthru
          _
      $region28: #{tpu_custom_call.1} parent=5 // pred_fallthru
        _
      %p232 = scmp.le.s32.totalorder 1, %s22
      %p233 = scmp.lt.s32.totalorder %s22, 3
      %p234 = pnand %p232, %p233
      %p235 = pneg %p234
      // Predicated region
      $region33: #{tpu_custom_call.1} parent=5 // pred_check
        _
      $region34: #{tpu_custom_call.1} parent=5 // pred_check_branch
        %237 = sbr.rel (%p234) target = $region36
      $region35: #{tpu_custom_call.1} parent=5 // pred_region
        %s238 = ssub.s32 %s22, 1
        %s239 = sand.u32 %s35, 1
        %s240 = scalar_lea.sflag [#allocation3], %s239
        %s241 = sand.u32 %s35, 1
        %s242 = smul.addr %s241, 64
        %s243 = scalar_lea.vmem [#allocation2], %s242
        // Predicated region
        $region37: #{tpu_custom_call.1} parent=35 // pred_check
          %p244 = pneg %p48
        $region38: #{tpu_custom_call.1} parent=35 // pred_check_branch
          %246 = sbr.rel (%p244) target = $region40
        $region39: #{tpu_custom_call.1} parent=35 // pred_region
          %247 = dma.done %s240, 1024
        $region40: #{tpu_custom_call.1} parent=35 // pred_fallthru
          _
        // Predicated region
        $region41: #{tpu_custom_call.1} parent=35 // pred_check
          %p248 = pneg %p69
        $region42: #{tpu_custom_call.1} parent=35 // pred_check_branch
          %250 = sbr.rel (%p248) target = $region44
        $region43: #{tpu_custom_call.1} parent=35 // pred_region
          %251 = dma.done [#allocation6], 2048
        $region44: #{tpu_custom_call.1} parent=35 // pred_fallthru
          _
        // Predicated region
        $region45: #{tpu_custom_call.1} parent=35 // pred_check
          %p252 = pneg %p111
        $region46: #{tpu_custom_call.1} parent=35 // pred_check_branch
          %254 = sbr.rel (%p252) target = $region48
        $region47: #{tpu_custom_call.1} parent=35 // pred_region
          %255 = dma.done [#allocation6], 6144
        $region48: #{tpu_custom_call.1} parent=35 // pred_fallthru
          _
        %s256 = sand.u32 %s35, 1
        %s257 = scalar_lea.sflag [#allocation3], %s256
        %s258 = sand.u32 %s35, 1
        %s259 = smul.addr %s258, 64
        %s260 = scalar_lea.vmem [#allocation2], %s259
        %p261 = pneg %p48
        %p262 = pneg %p45
        %p263 = pneg %p69
        %p264 = pneg %p66
        %p265 = pneg %p90
        %p266 = pneg %p87
        %p267 = pneg %p111
        %p268 = pneg %p108
        %p269 = pneg %p137
        %p270 = pneg %p134
        %s271 = sand.u32 %s124, 1
        %s272 = scalar_lea.sflag [#allocation4], %s271
        %s273 = sand.u32 %s124, 1
        %s274 = smul.addr %s273, 8
        %s275 = scalar_lea.vmem [#allocation8], %s274
        %p276 = pneg %p163
        %p277 = pneg %p160
        %s278 = sand.u32 %s150, 1
        %s279 = scalar_lea.sflag [#allocation10], %s278
        %s280 = sand.u32 %s150, 1
        %s281 = smul.addr %s280, 24
        %s282 = scalar_lea.vmem [#allocation9], %s281
        %s283 = smul.u32 8, %s27
        %v284 = vld [vmem:[%s243] sm:$0xff]
        %v285 = vld [vmem:[%s243 + $0x8] sm:$0xff]
        %v286 = vld [vmem:[%s243 + $0x10] sm:$0xff]
        %v287 = vld [vmem:[%s243 + $0x18] sm:$0xff]
        %v288 = vld [vmem:[%s243 + $0x20] sm:$0xff]
        %v289 = vld [vmem:[%s243 + $0x28] sm:$0xff]
        %v290 = vld [vmem:[%s243 + $0x30] sm:$0xff]
        %v291 = vld [vmem:[%s243 + $0x38] sm:$0xff]
        %v292 = vmul.f32 %v284, %v284
        %v293 = vmul.f32 %v285, %v285
        %v294 = vmul.f32 %v286, %v286
        %v295 = vmul.f32 %v287, %v287
        %v296 = vmul.f32 %v288, %v288
        %v297 = vmul.f32 %v289, %v289
        %v298 = vmul.f32 %v290, %v290
        %v299 = vmul.f32 %v291, %v291
        %300 = vadd.xlane.f32.xlu0 %v292
        %v301 = vpop.xlane.xlu0 %300
        %302 = vadd.xlane.f32.xlu0 %v293
        %v303 = vpop.xlane.xlu0 %302
        %304 = vadd.xlane.f32.xlu0 %v294
        %v305 = vpop.xlane.xlu0 %304
        %306 = vadd.xlane.f32.xlu0 %v295
        %v307 = vpop.xlane.xlu0 %306
        %308 = vadd.xlane.f32.xlu0 %v296
        %v309 = vpop.xlane.xlu0 %308
        %310 = vadd.xlane.f32.xlu0 %v297
        %v311 = vpop.xlane.xlu0 %310
        %312 = vadd.xlane.f32.xlu0 %v298
        %v313 = vpop.xlane.xlu0 %312
        %314 = vadd.xlane.f32.xlu0 %v299
        %v315 = vpop.xlane.xlu0 %314
        %v316 = vrsqrt.pop %v301
        %v317 = vmul.f32 %v301, %v316
        %vm318 = vcmp.eq.f32.partialorder %v301, inf
        %v319 = vsel %vm318, %v301, %v317
        %vm320 = vcmp.eq.f32.partialorder %v301, 0.0
        %v321 = vand.u32 %v301, 2147483648
        %v322 = vsel %vm320, %v321, %v319
        %v323 = vrsqrt.pop %v303
        %v324 = vmul.f32 %v303, %v323
        %vm325 = vcmp.eq.f32.partialorder %v303, inf
        %v326 = vsel %vm325, %v303, %v324
        %vm327 = vcmp.eq.f32.partialorder %v303, 0.0
        %v328 = vand.u32 %v303, 2147483648
        %v329 = vsel %vm327, %v328, %v326
        %v330 = vrsqrt.pop %v305
        %v331 = vmul.f32 %v305, %v330
        %vm332 = vcmp.eq.f32.partialorder %v305, inf
        %v333 = vsel %vm332, %v305, %v331
        %vm334 = vcmp.eq.f32.partialorder %v305, 0.0
        %v335 = vand.u32 %v305, 2147483648
        %v336 = vsel %vm334, %v335, %v333
        %v337 = vrsqrt.pop %v307
        %v338 = vmul.f32 %v307, %v337
        %vm339 = vcmp.eq.f32.partialorder %v307, inf
        %v340 = vsel %vm339, %v307, %v338
        %vm341 = vcmp.eq.f32.partialorder %v307, 0.0
        %v342 = vand.u32 %v307, 2147483648
        %v343 = vsel %vm341, %v342, %v340
        %v344 = vrsqrt.pop %v309
        %v345 = vmul.f32 %v309, %v344
        %vm346 = vcmp.eq.f32.partialorder %v309, inf
        %v347 = vsel %vm346, %v309, %v345
        %vm348 = vcmp.eq.f32.partialorder %v309, 0.0
        %v349 = vand.u32 %v309, 2147483648
        %v350 = vsel %vm348, %v349, %v347
        %v351 = vrsqrt.pop %v311
        %v352 = vmul.f32 %v311, %v351
        %vm353 = vcmp.eq.f32.partialorder %v311, inf
        %v354 = vsel %vm353, %v311, %v352
        %vm355 = vcmp.eq.f32.partialorder %v311, 0.0
        %v356 = vand.u32 %v311, 2147483648
        %v357 = vsel %vm355, %v356, %v354
        %v358 = vrsqrt.pop %v313
        %v359 = vmul.f32 %v313, %v358
        %vm360 = vcmp.eq.f32.partialorder %v313, inf
        %v361 = vsel %vm360, %v313, %v359
        %vm362 = vcmp.eq.f32.partialorder %v313, 0.0
        %v363 = vand.u32 %v313, 2147483648
        %v364 = vsel %vm362, %v363, %v361
        %v365 = vrsqrt.pop %v315
        %v366 = vmul.f32 %v315, %v365
        %vm367 = vcmp.eq.f32.partialorder %v315, inf
        %v368 = vsel %vm367, %v315, %v366
        %vm369 = vcmp.eq.f32.partialorder %v315, 0.0
        %v370 = vand.u32 %v315, 2147483648
        %v371 = vsel %vm369, %v370, %v368
        %v372 = vld [vmem:[#allocation5] sm:$0xff]
        %v373 = vld [vmem:[#allocation5 + $0x8] sm:$0xff]
        %v374 = vld [vmem:[#allocation5 + $0x10] sm:$0xff]
        %v375 = vld [vmem:[#allocation5 + $0x18] sm:$0xff]
        %v376 = vld [vmem:[#allocation5 + $0x20] sm:$0xff]
        %v377 = vld [vmem:[#allocation5 + $0x28] sm:$0xff]
        %v378 = vld [vmem:[#allocation5 + $0x30] sm:$0xff]
        %v379 = vld [vmem:[#allocation5 + $0x38] sm:$0xff]
        %v380 = vld [vmem:[#allocation5 + $0x40] sm:$0xff]
        %v381 = vld [vmem:[#allocation5 + $0x48] sm:$0xff]
        %v382 = vld [vmem:[#allocation5 + $0x50] sm:$0xff]
        %v383 = vld [vmem:[#allocation5 + $0x58] sm:$0xff]
        %v384 = vld [vmem:[#allocation5 + $0x60] sm:$0xff]
        %v385 = vld [vmem:[#allocation5 + $0x68] sm:$0xff]
        %v386 = vld [vmem:[#allocation5 + $0x70] sm:$0xff]
        %v387 = vld [vmem:[#allocation5 + $0x78] sm:$0xff]
        %388 = vmatprep.subr.mxu0 0.0
        %389 = vmatpush1.xpose.msra.mxu0 %v372
        %390 = vmatprep.subr.mxu0 0.0
        %391 = vmatpush1.xpose.msra.mxu0 %v373
        %392 = vmatprep.subr.mxu0 0.0
        %393 = vmatpush1.xpose.msra.mxu0 %v374
        %394 = vmatprep.subr.mxu0 0.0
        %395 = vmatpush1.xpose.msra.mxu0 %v375
        %396 = vmatprep.subr.mxu0 0.0
        %397 = vmatpush1.xpose.msra.mxu0 %v376
        %398 = vmatprep.subr.mxu0 0.0
        %399 = vmatpush1.xpose.msra.mxu0 %v377
        %400 = vmatprep.subr.mxu0 0.0
        %401 = vmatpush1.xpose.msra.mxu0 %v378
        %402 = vmatprep.subr.mxu0 0.0
        %403 = vmatpush1.xpose.msra.mxu0 %v379
        %404 = vmatprep.subr.mxu0 0.0
        %405 = vmatpush1.xpose.msra.mxu0 %v380
        %406 = vmatprep.subr.mxu0 0.0
        %407 = vmatpush1.xpose.msra.mxu0 %v381
        %408 = vmatprep.subr.mxu0 0.0
        %409 = vmatpush1.xpose.msra.mxu0 %v382
        %410 = vmatprep.subr.mxu0 0.0
        %411 = vmatpush1.xpose.msra.mxu0 %v383
        %412 = vmatprep.subr.mxu0 0.0
        %413 = vmatpush1.xpose.msra.mxu0 %v384
        %414 = vmatprep.subr.mxu0 0.0
        %415 = vmatpush1.xpose.msra.mxu0 %v385
        %416 = vmatprep.subr.mxu0 0.0
        %417 = vmatpush1.xpose.msra.mxu0 %v386
        %418 = vmatprep.subr.mxu0 0.0
        %419 = vmatpush1.xpose.msra.mxu0 %v387
        %420 = vmatprep.subr.mxu0 0.0
        %421 = vmatpush1.xpose.msra.mxu0 0.0
        %422 = vmatprep.subr.mxu0 0.0
        %423 = vmatpush1.xpose.msra.mxu0 0.0
        %424 = vmatprep.subr.mxu0 0.0
        %425 = vmatpush1.xpose.msra.mxu0 0.0
        %426 = vmatprep.subr.mxu0 0.0
        %427 = vmatpush1.xpose.msra.mxu0 0.0
        %428 = vmatprep.subr.mxu0 0.0
        %429 = vmatpush1.xpose.msra.mxu0 0.0
        %430 = vmatprep.subr.mxu0 0.0
        %431 = vmatpush1.xpose.msra.mxu0 0.0
        %432 = vmatprep.subr.mxu0 0.0
        %433 = vmatpush1.xpose.msra.mxu0 0.0
        %434 = vmatprep.subr.mxu0 0.0
        %435 = vmatpush1.xpose.msra.mxu0 0.0
        %436 = vmatprep.subr.mxu0 0.0
        %437 = vmatpush1.xpose.msra.mxu0 0.0
        %438 = vmatprep.subr.mxu0 0.0
        %439 = vmatpush1.xpose.msra.mxu0 0.0
        %440 = vmatprep.subr.mxu0 0.0
        %441 = vmatpush1.xpose.msra.mxu0 0.0
        %442 = vmatprep.subr.mxu0 0.0
        %443 = vmatpush1.xpose.msra.mxu0 0.0
        %444 = vmatprep.subr.mxu0 0.0
        %445 = vmatpush1.xpose.msra.mxu0 0.0
        %446 = vmatprep.subr.mxu0 0.0
        %447 = vmatpush1.xpose.msra.mxu0 0.0
        %448 = vmatprep.subr.mxu0 0.0
        %449 = vmatpush1.xpose.msra.mxu0 0.0
        %450 = vmatprep.subr.mxu0 0.0
        %451 = vmatpush1.xpose.msra.mxu0 0.0
        %452 = vmatprep.mubr.f32.mxu0 0.0
        %453 = vmatmul.mubr.f32.gmra.mrb[0].mxu0 %v284
        %v454 = vpop.f32.mrb[0].mxu0
        %v455 = vadd.f32 0.0, %v454
        %v456 = vpop.f32.mrb[0].mxu0
        %457 = vmatprep.mubr.f32.mxu0 0.0
        %458 = vmatmul.mubr.f32.gmra.mrb[0].mxu0 %v285
        %v459 = vpop.f32.mrb[0].mxu0
        %v460 = vadd.f32 0.0, %v459
        %v461 = vpop.f32.mrb[0].mxu0
        %462 = vmatprep.mubr.f32.mxu0 0.0
        %463 = vmatmul.mubr.f32.gmra.mrb[0].mxu0 %v286
        %v464 = vpop.f32.mrb[0].mxu0
        %v465 = vadd.f32 0.0, %v464
        %v466 = vpop.f32.mrb[0].mxu0
        %467 = vmatprep.mubr.f32.mxu0 0.0
        %468 = vmatmul.mubr.f32.gmra.mrb[0].mxu0 %v287
        %v469 = vpop.f32.mrb[0].mxu0
        %v470 = vadd.f32 0.0, %v469
        %v471 = vpop.f32.mrb[0].mxu0
        %472 = vmatprep.mubr.f32.mxu0 0.0
        %473 = vmatmul.mubr.f32.gmra.mrb[0].mxu0 %v288
        %v474 = vpop.f32.mrb[0].mxu0
        %v475 = vadd.f32 0.0, %v474
        %v476 = vpop.f32.mrb[0].mxu0
        %477 = vmatprep.mubr.f32.mxu0 0.0
        %478 = vmatmul.mubr.f32.gmra.mrb[0].mxu0 %v289
        %v479 = vpop.f32.mrb[0].mxu0
        %v480 = vadd.f32 0.0, %v479
        %v481 = vpop.f32.mrb[0].mxu0
        %482 = vmatprep.mubr.f32.mxu0 0.0
        %483 = vmatmul.mubr.f32.gmra.mrb[0].mxu0 %v290
        %v484 = vpop.f32.mrb[0].mxu0
        %v485 = vadd.f32 0.0, %v484
        %v486 = vpop.f32.mrb[0].mxu0
        %487 = vmatprep.mubr.f32.mxu0 0.0
        %488 = vmatmul.mubr.f32.gmra.mrb[0].mxu0 %v291
        %v489 = vpop.f32.mrb[0].mxu0
        %v490 = vadd.f32 0.0, %v489
        %v491 = vpop.f32.mrb[0].mxu0
        %492 = vdwg.mxu0
        %v493 = vld [vmem:[%s2] sm:$0x1]
        %v495 = vlaneseq
        %v496 = vshrl.u32 %v495, 7
        %v497 = vsub.s32 0, %v496
        %v498 = vrot.slane %v493, %v497
        %v500 = vadd.f32 %v322, %v498
        %v501 = vadd.f32 %v329, %v498
        %v502 = vadd.f32 %v336, %v498
        %v503 = vadd.f32 %v343, %v498
        %v504 = vadd.f32 %v350, %v498
        %v505 = vadd.f32 %v357, %v498
        %v506 = vadd.f32 %v364, %v498
        %v507 = vadd.f32 %v371, %v498
        %v508 = vsub.f32 %v500, %v455
        %v509 = vsub.f32 %v501, %v460
        %v510 = vsub.f32 %v502, %v465
        %v511 = vsub.f32 %v503, %v470
        %v512 = vsub.f32 %v504, %v475
        %v513 = vsub.f32 %v505, %v480
        %v514 = vsub.f32 %v506, %v485
        %v515 = vsub.f32 %v507, %v490
        %v516 = vmax.f32 %v508, 0.0
        %v517 = vmax.f32 %v509, 0.0
        %v518 = vmax.f32 %v510, 0.0
        %v519 = vmax.f32 %v511, 0.0
        %v520 = vmax.f32 %v512, 0.0
        %v521 = vmax.f32 %v513, 0.0
        %v522 = vmax.f32 %v514, 0.0
        %v523 = vmax.f32 %v515, 0.0
        %v524 = vrot.slane %v516, 4
        %v525 = vmin.f32 %v516, %v524
        %v526 = vrot.slane %v525, 2
        %v527 = vmin.f32 %v525, %v526
        %v528 = vrot.slane %v527, 1
        %v529 = vmin.f32 %v527, %v528
        %v530 = vrot.slane %v517, 4
        %v531 = vmin.f32 %v517, %v530
        %v532 = vrot.slane %v531, 2
        %v533 = vmin.f32 %v531, %v532
        %v534 = vrot.slane %v533, 1
        %v535 = vmin.f32 %v533, %v534
        %v536 = vrot.slane %v518, 4
        %v537 = vmin.f32 %v518, %v536
        %v538 = vrot.slane %v537, 2
        %v539 = vmin.f32 %v537, %v538
        %v540 = vrot.slane %v539, 1
        %v541 = vmin.f32 %v539, %v540
        %v542 = vrot.slane %v519, 4
        %v543 = vmin.f32 %v519, %v542
        %v544 = vrot.slane %v543, 2
        %v545 = vmin.f32 %v543, %v544
        %v546 = vrot.slane %v545, 1
        %v547 = vmin.f32 %v545, %v546
        %v548 = vrot.slane %v520, 4
        %v549 = vmin.f32 %v520, %v548
        %v550 = vrot.slane %v549, 2
        %v551 = vmin.f32 %v549, %v550
        %v552 = vrot.slane %v551, 1
        %v553 = vmin.f32 %v551, %v552
        %v554 = vrot.slane %v521, 4
        %v555 = vmin.f32 %v521, %v554
        %v556 = vrot.slane %v555, 2
        %v557 = vmin.f32 %v555, %v556
        %v558 = vrot.slane %v557, 1
        %v559 = vmin.f32 %v557, %v558
        %v560 = vrot.slane %v522, 4
        %v561 = vmin.f32 %v522, %v560
        %v562 = vrot.slane %v561, 2
        %v563 = vmin.f32 %v561, %v562
        %v564 = vrot.slane %v563, 1
        %v565 = vmin.f32 %v563, %v564
        %v566 = vrot.slane %v523, 4
        %v567 = vmin.f32 %v523, %v566
        %v568 = vrot.slane %v567, 2
        %v569 = vmin.f32 %v567, %v568
        %v570 = vrot.slane %v569, 1
        %v571 = vmin.f32 %v569, %v570
        %v572 = vrot.slane %v516, 4
        %v573 = vmax.f32 %v516, %v572
        %v574 = vrot.slane %v573, 2
        %v575 = vmax.f32 %v573, %v574
        %v576 = vrot.slane %v575, 1
        %v577 = vmax.f32 %v575, %v576
        %v578 = vrot.slane %v517, 4
        %v579 = vmax.f32 %v517, %v578
        %v580 = vrot.slane %v579, 2
        %v581 = vmax.f32 %v579, %v580
        %v582 = vrot.slane %v581, 1
        %v583 = vmax.f32 %v581, %v582
        %v584 = vrot.slane %v518, 4
        %v585 = vmax.f32 %v518, %v584
        %v586 = vrot.slane %v585, 2
        %v587 = vmax.f32 %v585, %v586
        %v588 = vrot.slane %v587, 1
        %v589 = vmax.f32 %v587, %v588
        %v590 = vrot.slane %v519, 4
        %v591 = vmax.f32 %v519, %v590
        %v592 = vrot.slane %v591, 2
        %v593 = vmax.f32 %v591, %v592
        %v594 = vrot.slane %v593, 1
        %v595 = vmax.f32 %v593, %v594
        %v596 = vrot.slane %v520, 4
        %v597 = vmax.f32 %v520, %v596
        %v598 = vrot.slane %v597, 2
        %v599 = vmax.f32 %v597, %v598
        %v600 = vrot.slane %v599, 1
        %v601 = vmax.f32 %v599, %v600
        %v602 = vrot.slane %v521, 4
        %v603 = vmax.f32 %v521, %v602
        %v604 = vrot.slane %v603, 2
        %v605 = vmax.f32 %v603, %v604
        %v606 = vrot.slane %v605, 1
        %v607 = vmax.f32 %v605, %v606
        %v608 = vrot.slane %v522, 4
        %v609 = vmax.f32 %v522, %v608
        %v610 = vrot.slane %v609, 2
        %v611 = vmax.f32 %v609, %v610
        %v612 = vrot.slane %v611, 1
        %v613 = vmax.f32 %v611, %v612
        %v614 = vrot.slane %v523, 4
        %v615 = vmax.f32 %v523, %v614
        %v616 = vrot.slane %v615, 2
        %v617 = vmax.f32 %v615, %v616
        %v618 = vrot.slane %v617, 1
        %v619 = vmax.f32 %v617, %v618
        %v620 = vrot.slane %v516, 4
        %v621 = vadd.f32 %v516, %v620
        %v622 = vrot.slane %v621, 2
        %v623 = vadd.f32 %v621, %v622
        %v624 = vrot.slane %v623, 1
        %v625 = vadd.f32 %v623, %v624
        %v626 = vrot.slane %v517, 4
        %v627 = vadd.f32 %v517, %v626
        %v628 = vrot.slane %v627, 2
        %v629 = vadd.f32 %v627, %v628
        %v630 = vrot.slane %v629, 1
        %v631 = vadd.f32 %v629, %v630
        %v632 = vrot.slane %v518, 4
        %v633 = vadd.f32 %v518, %v632
        %v634 = vrot.slane %v633, 2
        %v635 = vadd.f32 %v633, %v634
        %v636 = vrot.slane %v635, 1
        %v637 = vadd.f32 %v635, %v636
        %v638 = vrot.slane %v519, 4
        %v639 = vadd.f32 %v519, %v638
        %v640 = vrot.slane %v639, 2
        %v641 = vadd.f32 %v639, %v640
        %v642 = vrot.slane %v641, 1
        %v643 = vadd.f32 %v641, %v642
        %v644 = vrot.slane %v520, 4
        %v645 = vadd.f32 %v520, %v644
        %v646 = vrot.slane %v645, 2
        %v647 = vadd.f32 %v645, %v646
        %v648 = vrot.slane %v647, 1
        %v649 = vadd.f32 %v647, %v648
        %v650 = vrot.slane %v521, 4
        %v651 = vadd.f32 %v521, %v650
        %v652 = vrot.slane %v651, 2
        %v653 = vadd.f32 %v651, %v652
        %v654 = vrot.slane %v653, 1
        %v655 = vadd.f32 %v653, %v654
        %v656 = vrot.slane %v522, 4
        %v657 = vadd.f32 %v522, %v656
        %v658 = vrot.slane %v657, 2
        %v659 = vadd.f32 %v657, %v658
        %v660 = vrot.slane %v659, 1
        %v661 = vadd.f32 %v659, %v660
        %v662 = vrot.slane %v523, 4
        %v663 = vadd.f32 %v523, %v662
        %v664 = vrot.slane %v663, 2
        %v665 = vadd.f32 %v663, %v664
        %v666 = vrot.slane %v665, 1
        %v667 = vadd.f32 %v665, %v666
        %v668 = vmul.f32 %v625, 0.125
        %v669 = vmul.f32 %v631, 0.125
        %v670 = vmul.f32 %v637, 0.125
        %v671 = vmul.f32 %v643, 0.125
        %v672 = vmul.f32 %v649, 0.125
        %v673 = vmul.f32 %v655, 0.125
        %v674 = vmul.f32 %v661, 0.125
        %v675 = vmul.f32 %v667, 0.125
        %vm684 = vcmask 1041409
        %v685 = vsel %vm684, %v535, %v529
        %vm686 = vcmask 1042434
        %v687 = vsel %vm686, %v541, %v685
        %vm688 = vcmask 1043459
        %v689 = vsel %vm688, %v547, %v687
        %vm690 = vcmask 1044484
        %v691 = vsel %vm690, %v553, %v689
        %vm692 = vcmask 1045509
        %v693 = vsel %vm692, %v559, %v691
        %vm694 = vcmask 1046534
        %v695 = vsel %vm694, %v565, %v693
        %vm696 = vcmask 1047559
        %v697 = vsel %vm696, %v571, %v695
        %699 = vst [vmem:[%s282] sm:$0xff] %v697
        %v708 = vsel %vm684, %v583, %v577
        %v709 = vsel %vm686, %v589, %v708
        %v710 = vsel %vm688, %v595, %v709
        %v711 = vsel %vm690, %v601, %v710
        %v712 = vsel %vm692, %v607, %v711
        %v713 = vsel %vm694, %v613, %v712
        %v714 = vsel %vm696, %v619, %v713
        %s716 = scalar_lea.vmem %s282, 8 [#allocation9]
        %717 = vst [vmem:[%s716] sm:$0xff] %v714
        %v726 = vsel %vm684, %v669, %v668
        %v727 = vsel %vm686, %v670, %v726
        %v728 = vsel %vm688, %v671, %v727
        %v729 = vsel %vm690, %v672, %v728
        %v730 = vsel %vm692, %v673, %v729
        %v731 = vsel %vm694, %v674, %v730
        %v732 = vsel %vm696, %v675, %v731
        %s734 = scalar_lea.vmem %s282, 16 [#allocation9]
        %735 = vst [vmem:[%s734] sm:$0xff] %v732
        %v736 = vld [vmem:[#allocation7] sm:$0xff]
        %v737 = vld [vmem:[#allocation7 + $0x8] sm:$0xff]
        %v738 = vld [vmem:[#allocation7 + $0x10] sm:$0xff]
        %v739 = vld [vmem:[#allocation7 + $0x18] sm:$0xff]
        %v740 = vld [vmem:[#allocation7 + $0x20] sm:$0xff]
        %v741 = vld [vmem:[#allocation7 + $0x28] sm:$0xff]
        %v742 = vld [vmem:[#allocation7 + $0x30] sm:$0xff]
        %v743 = vld [vmem:[#allocation7 + $0x38] sm:$0xff]
        %v744 = vld [vmem:[#allocation7 + $0x40] sm:$0xff]
        %v745 = vld [vmem:[#allocation7 + $0x48] sm:$0xff]
        %v746 = vld [vmem:[#allocation7 + $0x50] sm:$0xff]
        %v747 = vld [vmem:[#allocation7 + $0x58] sm:$0xff]
        %v748 = vld [vmem:[#allocation7 + $0x60] sm:$0xff]
        %v749 = vld [vmem:[#allocation7 + $0x68] sm:$0xff]
        %v750 = vld [vmem:[#allocation7 + $0x70] sm:$0xff]
        %v751 = vld [vmem:[#allocation7 + $0x78] sm:$0xff]
        %s752 = scalar_lea.vmem [#allocation7], 128
        %v753 = vld [vmem:[%s752] sm:$0xff]
        %v754 = vld [vmem:[%s752 + $0x8] sm:$0xff]
        %v755 = vld [vmem:[%s752 + $0x10] sm:$0xff]
        %v756 = vld [vmem:[%s752 + $0x18] sm:$0xff]
        %v757 = vld [vmem:[%s752 + $0x20] sm:$0xff]
        %v758 = vld [vmem:[%s752 + $0x28] sm:$0xff]
        %v759 = vld [vmem:[%s752 + $0x30] sm:$0xff]
        %v760 = vld [vmem:[%s752 + $0x38] sm:$0xff]
        %v761 = vld [vmem:[%s752 + $0x40] sm:$0xff]
        %v762 = vld [vmem:[%s752 + $0x48] sm:$0xff]
        %v763 = vld [vmem:[%s752 + $0x50] sm:$0xff]
        %v764 = vld [vmem:[%s752 + $0x58] sm:$0xff]
        %v765 = vld [vmem:[%s752 + $0x60] sm:$0xff]
        %v766 = vld [vmem:[%s752 + $0x68] sm:$0xff]
        %v767 = vld [vmem:[%s752 + $0x70] sm:$0xff]
        %v768 = vld [vmem:[%s752 + $0x78] sm:$0xff]
        %769 = vmatprep.subr.mxu0 0.0
        %770 = vmatpush1.msra.mxu0 %v753
        %771 = vmatprep.subr.mxu0 0.0
        %772 = vmatpush1.msra.mxu0 %v754
        %773 = vmatprep.subr.mxu0 0.0
        %774 = vmatpush1.msra.mxu0 %v755
        %775 = vmatprep.subr.mxu0 0.0
        %776 = vmatpush1.msra.mxu0 %v756
        %777 = vmatprep.subr.mxu0 0.0
        %778 = vmatpush1.msra.mxu0 %v757
        %779 = vmatprep.subr.mxu0 0.0
        %780 = vmatpush1.msra.mxu0 %v758
        %781 = vmatprep.subr.mxu0 0.0
        %782 = vmatpush1.msra.mxu0 %v759
        %783 = vmatprep.subr.mxu0 0.0
        %784 = vmatpush1.msra.mxu0 %v760
        %785 = vmatprep.subr.mxu0 0.0
        %786 = vmatpush1.msra.mxu0 %v761
        %787 = vmatprep.subr.mxu0 0.0
        %788 = vmatpush1.msra.mxu0 %v762
        %789 = vmatprep.subr.mxu0 0.0
        %790 = vmatpush1.msra.mxu0 %v763
        %791 = vmatprep.subr.mxu0 0.0
        %792 = vmatpush1.msra.mxu0 %v764
        %793 = vmatprep.subr.mxu0 0.0
        %794 = vmatpush1.msra.mxu0 %v765
        %795 = vmatprep.subr.mxu0 0.0
        %796 = vmatpush1.msra.mxu0 %v766
        %797 = vmatprep.subr.mxu0 0.0
        %798 = vmatpush1.msra.mxu0 %v767
        %799 = vmatprep.subr.mxu0 0.0
        %800 = vmatpush1.msra.mxu0 %v768
        %801 = vmatprep.subr.mxu0 0.0
        %802 = vmatpush1.msra.mxu0 0.0
        %803 = vmatprep.subr.mxu0 0.0
        %804 = vmatpush1.msra.mxu0 0.0
        %805 = vmatprep.subr.mxu0 0.0
        %806 = vmatpush1.msra.mxu0 0.0
        %807 = vmatprep.subr.mxu0 0.0
        %808 = vmatpush1.msra.mxu0 0.0
        %809 = vmatprep.subr.mxu0 0.0
        %810 = vmatpush1.msra.mxu0 0.0
        %811 = vmatprep.subr.mxu0 0.0
        %812 = vmatpush1.msra.mxu0 0.0
        %813 = vmatprep.subr.mxu0 0.0
        %814 = vmatpush1.msra.mxu0 0.0
        %815 = vmatprep.subr.mxu0 0.0
        %816 = vmatpush1.msra.mxu0 0.0
        %817 = vmatprep.subr.mxu0 0.0
        %818 = vmatpush1.msra.mxu0 0.0
        %819 = vmatprep.subr.mxu0 0.0
        %820 = vmatpush1.msra.mxu0 0.0
        %821 = vmatprep.subr.mxu0 0.0
        %822 = vmatpush1.msra.mxu0 0.0
        %823 = vmatprep.subr.mxu0 0.0
        %824 = vmatpush1.msra.mxu0 0.0
        %825 = vmatprep.subr.mxu0 0.0
        %826 = vmatpush1.msra.mxu0 0.0
        %827 = vmatprep.subr.mxu0 0.0
        %828 = vmatpush1.msra.mxu0 0.0
        %829 = vmatprep.subr.mxu0 0.0
        %830 = vmatpush1.msra.mxu0 0.0
        %831 = vmatprep.subr.mxu0 0.0
        %832 = vmatpush1.msra.mxu0 0.0
        %833 = vmatprep.mubr.f32.mxu0 0.0
        %834 = vmatmul.mubr.f32.gmra.mrb[0].mxu0 %v714
        %v835 = vpop.f32.mrb[0].mxu0
        %v836 = vadd.f32 0.0, %v835
        %v837 = vpop.f32.mrb[0].mxu0
        %838 = vdwg.mxu0
        %839 = vmatprep.subr.mxu0 0.0
        %840 = vmatpush1.msra.mxu0 %v736
        %841 = vmatprep.subr.mxu0 0.0
        %842 = vmatpush1.msra.mxu0 %v737
        %843 = vmatprep.subr.mxu0 0.0
        %844 = vmatpush1.msra.mxu0 %v738
        %845 = vmatprep.subr.mxu0 0.0
        %846 = vmatpush1.msra.mxu0 %v739
        %847 = vmatprep.subr.mxu0 0.0
        %848 = vmatpush1.msra.mxu0 %v740
        %849 = vmatprep.subr.mxu0 0.0
        %850 = vmatpush1.msra.mxu0 %v741
        %851 = vmatprep.subr.mxu0 0.0
        %852 = vmatpush1.msra.mxu0 %v742
        %853 = vmatprep.subr.mxu0 0.0
        %854 = vmatpush1.msra.mxu0 %v743
        %855 = vmatprep.subr.mxu0 0.0
        %856 = vmatpush1.msra.mxu0 %v744
        %857 = vmatprep.subr.mxu0 0.0
        %858 = vmatpush1.msra.mxu0 %v745
        %859 = vmatprep.subr.mxu0 0.0
        %860 = vmatpush1.msra.mxu0 %v746
        %861 = vmatprep.subr.mxu0 0.0
        %862 = vmatpush1.msra.mxu0 %v747
        %863 = vmatprep.subr.mxu0 0.0
        %864 = vmatpush1.msra.mxu0 %v748
        %865 = vmatprep.subr.mxu0 0.0
        %866 = vmatpush1.msra.mxu0 %v749
        %867 = vmatprep.subr.mxu0 0.0
        %868 = vmatpush1.msra.mxu0 %v750
        %869 = vmatprep.subr.mxu0 0.0
        %870 = vmatpush1.msra.mxu0 %v751
        %871 = vmatprep.subr.mxu0 0.0
        %872 = vmatpush1.msra.mxu0 0.0
        %873 = vmatprep.subr.mxu0 0.0
        %874 = vmatpush1.msra.mxu0 0.0
        %875 = vmatprep.subr.mxu0 0.0
        %876 = vmatpush1.msra.mxu0 0.0
        %877 = vmatprep.subr.mxu0 0.0
        %878 = vmatpush1.msra.mxu0 0.0
        %879 = vmatprep.subr.mxu0 0.0
        %880 = vmatpush1.msra.mxu0 0.0
        %881 = vmatprep.subr.mxu0 0.0
        %882 = vmatpush1.msra.mxu0 0.0
        %883 = vmatprep.subr.mxu0 0.0
        %884 = vmatpush1.msra.mxu0 0.0
        %885 = vmatprep.subr.mxu0 0.0
        %886 = vmatpush1.msra.mxu0 0.0
        %887 = vmatprep.subr.mxu0 0.0
        %888 = vmatpush1.msra.mxu0 0.0
        %889 = vmatprep.subr.mxu0 0.0
        %890 = vmatpush1.msra.mxu0 0.0
        %891 = vmatprep.subr.mxu0 0.0
        %892 = vmatpush1.msra.mxu0 0.0
        %893 = vmatprep.subr.mxu0 0.0
        %894 = vmatpush1.msra.mxu0 0.0
        %895 = vmatprep.subr.mxu0 0.0
        %896 = vmatpush1.msra.mxu0 0.0
        %897 = vmatprep.subr.mxu0 0.0
        %898 = vmatpush1.msra.mxu0 0.0
        %899 = vmatprep.subr.mxu0 0.0
        %900 = vmatpush1.msra.mxu0 0.0
        %901 = vmatprep.subr.mxu0 0.0
        %902 = vmatpush1.msra.mxu0 0.0
        %903 = vmatprep.mubr.f32.mxu0 0.0
        %904 = vmatmul.mubr.f32.gmra.mrb[0].mxu0 %v697
        %v905 = vpop.f32.mrb[0].mxu0
        %v906 = vadd.f32 %v836, %v905
        %v907 = vpop.f32.mrb[0].mxu0
        %908 = vdwg.mxu0
        %s909 = scalar_lea.vmem [#allocation7], 256
        %v910 = vld [vmem:[%s909] sm:$0xff]
        %v911 = vld [vmem:[%s909 + $0x8] sm:$0xff]
        %v912 = vld [vmem:[%s909 + $0x10] sm:$0xff]
        %v913 = vld [vmem:[%s909 + $0x18] sm:$0xff]
        %v914 = vld [vmem:[%s909 + $0x20] sm:$0xff]
        %v915 = vld [vmem:[%s909 + $0x28] sm:$0xff]
        %v916 = vld [vmem:[%s909 + $0x30] sm:$0xff]
        %v917 = vld [vmem:[%s909 + $0x38] sm:$0xff]
        %v918 = vld [vmem:[%s909 + $0x40] sm:$0xff]
        %v919 = vld [vmem:[%s909 + $0x48] sm:$0xff]
        %v920 = vld [vmem:[%s909 + $0x50] sm:$0xff]
        %v921 = vld [vmem:[%s909 + $0x58] sm:$0xff]
        %v922 = vld [vmem:[%s909 + $0x60] sm:$0xff]
        %v923 = vld [vmem:[%s909 + $0x68] sm:$0xff]
        %v924 = vld [vmem:[%s909 + $0x70] sm:$0xff]
        %v925 = vld [vmem:[%s909 + $0x78] sm:$0xff]
        %926 = vmatprep.subr.mxu0 0.0
        %927 = vmatpush1.msra.mxu0 %v910
        %928 = vmatprep.subr.mxu0 0.0
        %929 = vmatpush1.msra.mxu0 %v911
        %930 = vmatprep.subr.mxu0 0.0
        %931 = vmatpush1.msra.mxu0 %v912
        %932 = vmatprep.subr.mxu0 0.0
        %933 = vmatpush1.msra.mxu0 %v913
        %934 = vmatprep.subr.mxu0 0.0
        %935 = vmatpush1.msra.mxu0 %v914
        %936 = vmatprep.subr.mxu0 0.0
        %937 = vmatpush1.msra.mxu0 %v915
        %938 = vmatprep.subr.mxu0 0.0
        %939 = vmatpush1.msra.mxu0 %v916
        %940 = vmatprep.subr.mxu0 0.0
        %941 = vmatpush1.msra.mxu0 %v917
        %942 = vmatprep.subr.mxu0 0.0
        %943 = vmatpush1.msra.mxu0 %v918
        %944 = vmatprep.subr.mxu0 0.0
        %945 = vmatpush1.msra.mxu0 %v919
        %946 = vmatprep.subr.mxu0 0.0
        %947 = vmatpush1.msra.mxu0 %v920
        %948 = vmatprep.subr.mxu0 0.0
        %949 = vmatpush1.msra.mxu0 %v921
        %950 = vmatprep.subr.mxu0 0.0
        %951 = vmatpush1.msra.mxu0 %v922
        %952 = vmatprep.subr.mxu0 0.0
        %953 = vmatpush1.msra.mxu0 %v923
        %954 = vmatprep.subr.mxu0 0.0
        %955 = vmatpush1.msra.mxu0 %v924
        %956 = vmatprep.subr.mxu0 0.0
        %957 = vmatpush1.msra.mxu0 %v925
        %958 = vmatprep.subr.mxu0 0.0
        %959 = vmatpush1.msra.mxu0 0.0
        %960 = vmatprep.subr.mxu0 0.0
        %961 = vmatpush1.msra.mxu0 0.0
        %962 = vmatprep.subr.mxu0 0.0
        %963 = vmatpush1.msra.mxu0 0.0
        %964 = vmatprep.subr.mxu0 0.0
        %965 = vmatpush1.msra.mxu0 0.0
        %966 = vmatprep.subr.mxu0 0.0
        %967 = vmatpush1.msra.mxu0 0.0
        %968 = vmatprep.subr.mxu0 0.0
        %969 = vmatpush1.msra.mxu0 0.0
        %970 = vmatprep.subr.mxu0 0.0
        %971 = vmatpush1.msra.mxu0 0.0
        %972 = vmatprep.subr.mxu0 0.0
        %973 = vmatpush1.msra.mxu0 0.0
        %974 = vmatprep.subr.mxu0 0.0
        %975 = vmatpush1.msra.mxu0 0.0
        %976 = vmatprep.subr.mxu0 0.0
        %977 = vmatpush1.msra.mxu0 0.0
        %978 = vmatprep.subr.mxu0 0.0
        %979 = vmatpush1.msra.mxu0 0.0
        %980 = vmatprep.subr.mxu0 0.0
        %981 = vmatpush1.msra.mxu0 0.0
        %982 = vmatprep.subr.mxu0 0.0
        %983 = vmatpush1.msra.mxu0 0.0
        %984 = vmatprep.subr.mxu0 0.0
        %985 = vmatpush1.msra.mxu0 0.0
        %986 = vmatprep.subr.mxu0 0.0
        %987 = vmatpush1.msra.mxu0 0.0
        %988 = vmatprep.subr.mxu0 0.0
        %989 = vmatpush1.msra.mxu0 0.0
        %990 = vmatprep.mubr.f32.mxu0 0.0
        %991 = vmatmul.mubr.f32.gmra.mrb[0].mxu0 %v732
        %v992 = vpop.f32.mrb[0].mxu0
        %v993 = vadd.f32 0.0, %v992
        %v994 = vpop.f32.mrb[0].mxu0
        %995 = vdwg.mxu0
        %v996 = vadd.f32 %v906, %v993
        %v997 = vlaneseq
        %v998 = vand.u32 %v997, 127
        %vm999 = vcmp.lt.s32.totalorder %v998, 3
        %v1000 = vsel %vm999, %v996, -inf
        %1001 = vmax.xlane.f32.xlu0 %v1000
        %v1002 = vpop.xlane.xlu0 %1001
        %v1003 = vsub.f32 %v1000, %v1002
        %v1004 = vmul.f32 %v1003, 1.442695
        %v1005 = vpow.pop %v1004
        %1006 = vadd.xlane.f32.xlu0 %v1005
        %v1007 = vpop.xlane.xlu0 %1006
        %v1008 = vrcp.pop %v1007
        %v1009 = vmul.f32 %v1005, %v1008
        %1010 = vst [vmem:[%s275] sm:$0xff] %v1009
        %s1011 = sand.u32 %s124, 1
        %s1012 = scalar_lea.sflag [#allocation4], %s1011
        %s1013 = sand.u32 %s124, 1
        %s1014 = smul.addr %s1013, 8
        %s1015 = scalar_lea.vmem [#allocation8], %s1014
        %s1016 = sand.u32 %s150, 1
        %s1017 = scalar_lea.sflag [#allocation10], %s1016
        %s1018 = sand.u32 %s150, 1
        %s1019 = smul.addr %s1018, 24
        %s1020 = scalar_lea.vmem [#allocation9], %s1019
        // Predicated region
        $region49: #{tpu_custom_call.1} parent=35 // pred_check
          %p1021 = pneg %p134
        $region50: #{tpu_custom_call.1} parent=35 // pred_check_branch
          %1023 = sbr.rel (%p1021) target = $region52
        $region51: #{tpu_custom_call.1} parent=35 // pred_region
          %s1025 = ssub.s32 128, 128
          %1026 = vsyncadd %s1012, %s1025
          %s1027 = smul.addr %s27, 128
          %s1028 = scalar_lea.hbm %s4, %s1027
          %s1030 = sshll.u32 %s1015, 4
          %s1031 = int_to_ptr.vmem [resolvable:$true] %s1030
          %1033 = dma.vmem_to_hbm [thread:$0]  %s1031, 128, %s1028, %s1012
        $region52: #{tpu_custom_call.1} parent=35 // pred_fallthru
          _
        // Predicated region
        $region53: #{tpu_custom_call.1} parent=35 // pred_check
          %p1034 = pneg %p160
        $region54: #{tpu_custom_call.1} parent=35 // pred_check_branch
          %1036 = sbr.rel (%p1034) target = $region56
        $region55: #{tpu_custom_call.1} parent=35 // pred_region
          %s1038 = ssub.s32 384, 384
          %1039 = vsyncadd %s1017, %s1038
          %s1040 = smul.addr %s27, 128
          %s1041 = scalar_lea.hbm %s5, %s1040
          %s1042 = sshll.u32 %s1020, 4
          %s1043 = int_to_ptr.vmem [resolvable:$true] %s1042
          %1048 = dma.vmem_to_hbm [thread:$0]  %s1043, 384, %s1041, %s1017, 128, 256, 8
        $region56: #{tpu_custom_call.1} parent=35 // pred_fallthru
          _
      $region36: #{tpu_custom_call.1} parent=5 // pred_fallthru
        _
      %p1049 = scmp.le.s32.totalorder 2, %s22
      // Predicated region
      $region57: #{tpu_custom_call.1} parent=5 // pred_check
        %p1050 = pneg %p1049
      $region58: #{tpu_custom_call.1} parent=5 // pred_check_branch
        %1052 = sbr.rel (%p1050) target = $region60
      $region59: #{tpu_custom_call.1} parent=5 // pred_region
        %s1053 = ssub.s32 %s22, 2
        // Predicated region
        $region61: #{tpu_custom_call.1} parent=59 // pred_check
          %p1054 = pneg %p140
        $region62: #{tpu_custom_call.1} parent=59 // pred_check_branch
          %1056 = sbr.rel (%p1054) target = $region64
        $region63: #{tpu_custom_call.1} parent=59 // pred_region
          %s1057 = sand.u32 %s125, 1
          %s1058 = scalar_lea.sflag [#allocation4], %s1057
          %s1059 = sand.u32 %s125, 1
          %s1060 = smul.addr %s1059, 8
          %s1061 = scalar_lea.vmem [#allocation8], %s1060
          %1062 = dma.done %s1058, 128
        $region64: #{tpu_custom_call.1} parent=59 // pred_fallthru
          _
        // Predicated region
        $region65: #{tpu_custom_call.1} parent=59 // pred_check
          %p1063 = pneg %p166
        $region66: #{tpu_custom_call.1} parent=59 // pred_check_branch
          %1065 = sbr.rel (%p1063) target = $region68
        $region67: #{tpu_custom_call.1} parent=59 // pred_region
          %s1066 = sand.u32 %s151, 1
          %s1067 = scalar_lea.sflag [#allocation10], %s1066
          %s1068 = sand.u32 %s151, 1
          %s1069 = smul.addr %s1068, 24
          %s1070 = scalar_lea.vmem [#allocation9], %s1069
          %1071 = dma.done %s1067, 384
        $region68: #{tpu_custom_call.1} parent=59 // pred_fallthru
          _
      $region60: #{tpu_custom_call.1} parent=5 // pred_fallthru
        _
    $region6: #{tpu_custom_call.1} parent=1 // loop_footer
      %s26 = sadd.s32 1, %s22
    $region7: #{tpu_custom_call.1} parent=1 // loop_footer_branch
      %21 = sbr.rel target = $region3
    $region8: #{tpu_custom_call.1} parent=1 // loop_exit
      _
    %1072 = vsyncpa [#allocation3], 1
    %s1073 = scalar_lea.sflag [#allocation3], 1
    %1074 = vsyncpa %s1073, 1
    %1075 = vsyncpa [#allocation6], 1
    %1076 = vsyncpa [#allocation4], 1
    %s1077 = scalar_lea.sflag [#allocation4], 1
    %1078 = vsyncpa %s1077, 1
    %1079 = vsyncpa [#allocation10], 1
    %s1080 = scalar_lea.sflag [#allocation10], 1
    %1081 = vsyncpa %s1080, 1

</llo_original>
